<compile_context>
chip_gen: v6e
topology: v6e:2x2x1
jax: 0.10.0
libtpu: 0.0.40
codegen_flags: <defaults>
</compile_context>

<pallas_src>
import functools

import jax
import jax.numpy as jnp
from jax import lax
from jax.experimental import pallas as pl
from jax.experimental.pallas import tpu as pltpu


def _round_up(x, m):
    return (x + m - 1) // m * m


def _choose_row_tiling(n, b, *, max_tile=256, min_tile=64, min_total_steps=8):
    """Pick (TN, Npad) for the patch-row axis.

    TN is a multiple of 8 (or == n for tiny patch grids); Npad is n rounded up
    to a multiple of TN. Targets >= min_total_steps total grid steps so the
    pipeline has work to overlap, and >= 2 steps on the n axis when b == 1 so
    both v7x TensorCores are used.
    """
    if n < 16:                                     # tiny patch grid: one full tile
        return n, n
    want = max((min_total_steps + b - 1) // b, 2 if b == 1 else 1)
    cap = max(8, (n // want) // 8 * 8)             # tile giving ~`want` n-steps
    cap = min(max(cap, min(min_tile, n)), max_tile)
    # Prefer the largest multiple-of-8 divisor of n that is <= cap.
    for t in range(cap - cap % 8, 7, -8):
        if n % t == 0:
            return t, n
    # No clean divisor: pad n up to a multiple of the capped tile.
    t = max(8, cap - cap % 8)
    return t, _round_up(n, t)


def _vmem_limit_bytes(tn, k, d, posb_itemsize, out_itemsize):
    """Tile-derived VMEM budget (double-buffered tiles, 2x slack)."""
    kp = _round_up(k, 128)
    dp = _round_up(d, 128)
    tnp = _round_up(tn, 8)
    weight = kp * dp * 2                    # bf16, grid-invariant (counted x2)
    patch = tnp * kp * 2                    # bf16 stream
    posb = tnp * dp * posb_itemsize
    out = tnp * dp * out_itemsize
    need = 2 * (weight + patch + posb + out)
    return int(max(2 * need, 8 * 1024 * 1024))


def _embed_kernel(patch_ref, w_ref, posb_ref, out_ref):
    # patch_ref: (1, TN, K) bf16    w_ref: (K, D) bf16
    # posb_ref:  (TN, D) f32/bf16 (pos_emb + conv_bias)    out_ref: (1, TN, D)
    acc = jnp.dot(patch_ref[0], w_ref[...], preferred_element_type=jnp.float32)
    acc = acc + posb_ref[...].astype(jnp.float32)
    out_ref[0] = acc.astype(out_ref.dtype)


def siglip_vision_embeddings(pixel_values, conv_weight, conv_bias, pos_embedding,
                             patch_size, *, out_dtype=None):
    """
    pixel_values:  (B, C, H, W)  NCHW (PyTorch layout)
    conv_weight:   (D, C, P, P)  PyTorch Conv2d weight
    conv_bias:     (D,)
    pos_embedding: (N, D)        N = (H//P) * (W//P)
    returns:       (B, N, D)     dtype = out_dtype or pixel_values.dtype
                   (pass out_dtype=jnp.bfloat16 when downstream layers are bf16
                    to halve the writeback bytes)
    """
    B, C, H, W = pixel_values.shape
    P = patch_size
    Hp, Wp = H // P, W // P
    N = Hp * Wp
    D = conv_weight.shape[0]
    K = C * P * P
    out_dtype = out_dtype if out_dtype is not None else pixel_values.dtype

    # im2col in bf16 (halves HBM bytes). Flatten order (C, P, P) matches the
    # PyTorch Conv2d OIHW weight flatten order. No K-padding: the kernel uses a
    # full-dim K block and Mosaic pads lanes in-vreg, so the only producer that
    # may materialize is this single (fusible) transpose.
    patches = pixel_values.astype(jnp.bfloat16).reshape(B, C, Hp, P, Wp, P)
    patches = patches.transpose(0, 2, 4, 1, 3, 5).reshape(B, N, K)

    # One-time tiny copy: (K, D) bf16 so the kernel is a plain MXU contraction
    # with no per-step weight transpose.
    wt = conv_weight.reshape(D, K).T.astype(jnp.bfloat16)

    # Fold conv bias into the position embedding (exact in f32). bf16 when the
    # stream cannot be amortized across batch (B == 1).
    posb_dtype = jnp.bfloat16 if B == 1 else jnp.float32
    posb = (pos_embedding.astype(jnp.float32)
            + conv_bias.astype(jnp.float32)[None, :]).astype(posb_dtype)

    TN, Npad = _choose_row_tiling(N, B)
    if Npad != N:  # zero rows are inert; output is sliced back below
        patches = jnp.pad(patches, ((0, 0), (0, Npad - N), (0, 0)))
        posb = jnp.pad(posb, ((0, Npad - N), (0, 0)))
    n_steps = Npad // TN
    grid = (n_steps, B)   # n outermost, b innermost -> posb/weight stay resident

    grid_spec = pltpu.PrefetchScalarGridSpec(
        num_scalar_prefetch=0,
        grid=grid,
        in_specs=[
            # Patch tile streamed per (row-tile, batch) step.
            pl.BlockSpec((1, TN, K), lambda n, b: (b, n, 0)),
            # Weight is grid-invariant -> resident in VMEM.
            pl.BlockSpec((K, D), lambda n, b: (0, 0)),
            # pos+bias tile is invariant along the inner batch axis.
            pl.BlockSpec((TN, D), lambda n, b: (n, 0)),
        ],
        out_specs=pl.BlockSpec((1, TN, D), lambda n, b: (b, n, 0)),
    )

    vmem_limit = _vmem_limit_bytes(
        TN, K, D, jnp.dtype(posb_dtype).itemsize, jnp.dtype(out_dtype).itemsize)

    out = pl.pallas_call(
        _embed_kernel,
        out_shape=jax.ShapeDtypeStruct((B, Npad, D), out_dtype),
        grid_spec=grid_spec,
        compiler_params=pltpu.CompilerParams(
            dimension_semantics=("parallel", "parallel"),
            allow_input_fusion=[True, True, True],
            vmem_limit_bytes=vmem_limit),
    )(patches, wt, posb)

    if Npad != N:
        out = out[:, :N, :]
    return out


# ----------------------------- references ---------------------------------

def _reference_f32(pixel_values, conv_weight, conv_bias, pos_embedding, patch_size):
    # Pure-JAX f32 mirror of the PyTorch forward (conv + flatten + transpose + pos).
    out = lax.conv_general_dilated(
        pixel_values, conv_weight,
        window_strides=(patch_size, patch_size), padding="VALID",
        dimension_numbers=("NCHW", "OIHW", "NCHW"))
    out = out + conv_bias[None, :, None, None]
    B, D = out.shape[0], out.shape[1]
    out = out.reshape(B, D, -1).transpose(0, 2, 1)          # (B, N, D)
    return out + pos_embedding[None, :, :]


def _reference_bf16(pixel_values, conv_weight, conv_bias, pos_embedding, patch_size):
    # Same bf16-rounded operands as the kernel, plain-JAX matmul (tight check).
    B, C, H, W = pixel_values.shape
    P = patch_size
    Hp, Wp = H // P, W // P
    N = Hp * Wp
    D = conv_weight.shape[0]
    K = C * P * P
    patches = pixel_values.astype(jnp.bfloat16).reshape(B, C, Hp, P, Wp, P)
    patches = patches.transpose(0, 2, 4, 1, 3, 5).reshape(B, N, K)
    w = conv_weight.reshape(D, K).astype(jnp.bfloat16)
    acc = jnp.einsum("bnk,dk->bnd", patches, w,
                     preferred_element_type=jnp.float32)
    posb_dtype = jnp.bfloat16 if B == 1 else jnp.float32
    posb = (pos_embedding.astype(jnp.float32)
            + conv_bias.astype(jnp.float32)[None, :]).astype(posb_dtype)
    return acc + posb.astype(jnp.float32)[None, :, :]


def _run_case(batch, channels, image_size, patch_size, hidden, seed):
    num_patches = (image_size // patch_size) ** 2
    key = jax.random.PRNGKey(seed)
    k_px, k_w, k_b, k_pos = jax.random.split(key, 4)

    pixel_values = jax.random.normal(
        k_px, (batch, channels, image_size, image_size), dtype=jnp.float32)
    conv_weight = jax.random.normal(
        k_w, (hidden, channels, patch_size, patch_size), dtype=jnp.float32) * 0.02
    conv_bias = jax.random.normal(k_b, (hidden,), dtype=jnp.float32) * 0.02
    pos_embedding = jax.random.normal(
        k_pos, (num_patches, hidden), dtype=jnp.float32) * 0.02

    fn = jax.jit(functools.partial(siglip_vision_embeddings, patch_size=patch_size))
    out = fn(pixel_values, conv_weight, conv_bias, pos_embedding)
    out = jax.block_until_ready(out)

    assert out.shape == (batch, num_patches, hidden), out.shape

    # Tight check vs. a plain-JAX computation using the same bf16-rounded operands.
    ref_bf16 = _reference_bf16(
        pixel_values, conv_weight, conv_bias, pos_embedding, patch_size)
    assert jnp.allclose(out, ref_bf16, atol=2e-3, rtol=2e-3), \
        float(jnp.max(jnp.abs(out - ref_bf16)))

    # Loose semantic check vs. the exact f32 PyTorch-equivalent forward
    # (looser tolerance because the kernel matmul runs bf16 x bf16 -> f32).
    ref_f32 = _reference_f32(
        pixel_values, conv_weight, conv_bias, pos_embedding, patch_size)
    assert jnp.allclose(out, ref_f32, atol=2e-2, rtol=2e-2), \
        float(jnp.max(jnp.abs(out - ref_f32)))


if __name__ == "__main__":
    # Small config consistent with the module: C=4, image=16, patch=8 -> N=4,
    # hidden=32.
    _run_case(batch=2, channels=4, image_size=16, patch_size=8, hidden=32, seed=0)

    # Canonical-geometry sanity check (scaled-down hidden dim): C=3, image=224,
    # patch=14 -> N=256, K=588 (non-128-aligned contraction), B=1 exercises the
    # TN cap (TN=64, 4 n-steps), bf16 posb, and the grid reorder.
    _run_case(batch=1, channels=3, image_size=224, patch_size=14, hidden=256, seed=1)

    print("KERNEL_OK")
</pallas_src>

<mosaic_0001>
module attributes {stable_mosaic.version = 11 : i64} {
  func.func @_embed_kernel(%arg0: i32, %arg1: i32, %arg2: memref<1x4x256xbf16, #tpu.memory_space<vmem>>, %arg3: memref<256x32xbf16, #tpu.memory_space<vmem>>, %arg4: memref<4x32xf32, #tpu.memory_space<vmem>>, %arg5: memref<1x4x32xf32, #tpu.memory_space<vmem>>) attributes {dimension_semantics = [#tpu.dimension_semantics<parallel>, #tpu.dimension_semantics<parallel>], iteration_bounds = array<i64: 1, 2>, scalar_prefetch = 0 : i64, scratch_operands = 0 : i64, tpu.core_type = #tpu.core_type<tc>, window_params = [{transform_indices = @transform_0, window_bounds = array<i64: 1, 4, 256>}, {pipeline_mode = #tpu.pipeline_mode<synchronous>, transform_indices = @transform_1, window_bounds = array<i64: 256, 32>}, {transform_indices = @transform_2, window_bounds = array<i64: 4, 32>}, {transform_indices = @transform_3, window_bounds = array<i64: 1, 4, 32>}]} {
    %c0 = arith.constant 0 : index
    %c0_0 = arith.constant 0 : index
    %c0_1 = arith.constant 0 : index
    %0 = vector.load %arg2[%c0, %c0_0, %c0_1] : memref<1x4x256xbf16, #tpu.memory_space<vmem>>, vector<1x4x256xbf16>
    %1 = vector.shape_cast %0 : vector<1x4x256xbf16> to vector<4x256xbf16>
    %c0_2 = arith.constant 0 : index
    %c0_3 = arith.constant 0 : index
    %2 = vector.load %arg3[%c0_2, %c0_3] : memref<256x32xbf16, #tpu.memory_space<vmem>>, vector<256x32xbf16>
    %cst = arith.constant dense<0.000000e+00> : vector<4x32xf32>
    %3 = tpu.matmul %1, %2, %cst {dimension_numbers = #tpu.dot_dimension_numbers<[1], [0], [0], [1], [0, 0, 1, 1], [], []>} : vector<4x256xbf16>, vector<256x32xbf16>, vector<4x32xf32> -> vector<4x32xf32>
    %c0_4 = arith.constant 0 : index
    %c0_5 = arith.constant 0 : index
    %4 = vector.load %arg4[%c0_4, %c0_5] : memref<4x32xf32, #tpu.memory_space<vmem>>, vector<4x32xf32>
    %5 = arith.addf %3, %4 : vector<4x32xf32>
    %c0_6 = arith.constant 0 : index
    %c0_7 = arith.constant 0 : index
    %c0_8 = arith.constant 0 : index
    %6 = vector.load %arg5[%c0_6, %c0_7, %c0_8] : memref<1x4x32xf32, #tpu.memory_space<vmem>>, vector<1x4x32xf32>
    %7 = vector.shape_cast %6 : vector<1x4x32xf32> to vector<4x32xf32>
    %8 = vector.shape_cast %5 : vector<4x32xf32> to vector<1x4x32xf32>
    tpu.vector_store %arg5[%c0_6, %c0_7, %c0_8], %8 {strides = array<i32>} : memref<1x4x32xf32, #tpu.memory_space<vmem>>, vector<1x4x32xf32>,
    return
  }
  func.func @transform_0(%arg0: i32, %arg1: i32) -> (i32, i32, i32) {
    %c0_i32 = arith.constant 0 : i32
    %c0_i32_0 = arith.constant 0 : i32
    return %arg1, %arg0, %c0_i32 : i32, i32, i32
  }
  func.func @transform_1(%arg0: i32, %arg1: i32) -> (i32, i32) {
    %c0_i32 = arith.constant 0 : i32
    %c0_i32_0 = arith.constant 0 : i32
    %c0_i32_1 = arith.constant 0 : i32
    return %c0_i32, %c0_i32_0 : i32, i32
  }
  func.func @transform_2(%arg0: i32, %arg1: i32) -> (i32, i32) {
    %c0_i32 = arith.constant 0 : i32
    %c0_i32_0 = arith.constant 0 : i32
    return %arg0, %c0_i32 : i32, i32
  }
  func.func @transform_3(%arg0: i32, %arg1: i32) -> (i32, i32, i32) {
    %c0_i32 = arith.constant 0 : i32
    %c0_i32_0 = arith.constant 0 : i32
    return %arg1, %arg0, %c0_i32 : i32, i32, i32
  }
}

</mosaic_0001>

<llo_original>
// kernel: siglip_vision_embeddings.2
$region0: #{siglip_vision_embeddings.2}
  #allocation0 [shape = 'u32[]', space=smem, size = 0x4, offset = 0x4, fixed_abs, tag = 'smem constant byte address 0x4 - core index']
  #allocation1 [shape = 'u32[144,128]{1,0:T(1,128)}', space=vmem, size = 0x12000, scoped, tag = 'internal scratch']
  %s0 = inlined_call_operand.vmem [shape: bf16[2,4,256], index: 0, kind: input, shape index: {}]
  %s1 = inlined_call_operand.vmem [shape: bf16[256,32], index: 1, kind: input, shape index: {}]
  %s2 = inlined_call_operand.vmem [shape: f32[4,32], index: 2, kind: input, shape index: {}]
  %s3 = inlined_call_operand.vmem [shape: f32[32], index: 3, kind: input, shape index: {}]
  %s4 = inlined_call_operand.hbm [shape: f32[2,4,32], index: 4, kind: output, shape index: {}]
  %s5 = sld [smem:[#allocation0]]
  $region49: #{siglip_vision_embeddings.2} parent=0
    _
  %s7 = ssub.s32 1, %s5
  %s8 = scalar_select 0, %s7, %s5
  $region1: #{siglip_vision_embeddings.2} parent=0
    #allocation2 [shape = 'u8[4096]{0}', space=vmem, size = 0x1000, scoped, tag = 'output window, operand 0']
    #allocation3 [shape = 's32[2]{0}', space=sflag, size = 0x8, scoped, tag = 'scoped memory for siglip_vision_embeddings.2']
    %9 = vsyncpa [#allocation3], 0
    %s10 = scalar_lea.sflag [#allocation3], 1
    %11 = vsyncpa %s10, 0
    loop: start=0, step=1, limit=4
    $region2: #{siglip_vision_embeddings.2} parent=1 // loop_pre_header
      _
    $region3: #{siglip_vision_embeddings.2} parent=1 // loop_header
      %s13 = sphi 0, %s17
      %p14 = scmp.ge.s32.totalorder %s13, 4
      %s20 = sphi 0, %s32
      %s21 = sphi 0, %s28
      %s22 = sphi 0, %s20
      %s23 = sphi 0, %s21
      %s24 = sphi 0, %s22
      %s25 = sphi 0, %s23
      %s37 = sphi 0, %s39
      %s40 = sphi 0, %s37
      %s41 = sphi 0, %s40
      %s57 = sphi 0, %s41
      %s61 = sphi 0, %s61
      %s63 = sphi 0, %s61
      %s64 = sphi 0, %s63
      %s78 = sphi 0, %s64
      %s84 = sphi 0, %s86
      %s87 = sphi 0, %s84
      %s88 = sphi 0, %s87
      %s104 = sphi 0, %s88
      %s108 = sphi 0, %s108
      %s110 = sphi 0, %s108
      %s111 = sphi 0, %s110
      %s125 = sphi 0, %s111
      %s133 = sphi 0, %s135
      %s136 = sphi 0, %s133
      %s137 = sphi 0, %s136
      %s153 = sphi 0, %s137
    $region4: #{siglip_vision_embeddings.2} parent=1 // loop_header_branch
      %16 = sbr.rel (%p14) target = $region8
    $region5: #{siglip_vision_embeddings.2} parent=1 // loop_body
      %s18 = ssub.s32 %s13, 1
      %s19 = ssub.s32 %s13, 2
      %s26 = sadd.s32 1, %s21
      %p27 = scmp.ge.s32.totalorder %s26, 2
      %s28 = scalar_select %p27, 0, %s26
      %s29 = sadd.s32 1, %s20
      %s30 = scalar_select %p27, %s29, %s20
      %p31 = scmp.ge.s32.totalorder %s30, 1
      %s32 = scalar_select %p31, 0, %s30
      %s33 = ssub.s32 %s21, %s28
      %s34 = ssub.s32 %s20, %s32
      %s35 = sor.u32 %s33, %s34
      %p36 = scmp.eq.s32.totalorder %s35, 0
      %s38 = sadd.s32 %s37, 1
      %s39 = scalar_select %p36, %s37, %s38
      %p42 = pneg %p36
      %p43 = scmp.eq.s32.totalorder %s13, 1
      %p44 = por %p42, %p43
      %p45 = scmp.ne.s32.totalorder %s37, %s40
      %p46 = scmp.eq.s32.totalorder %s13, 0
      %p47 = por %p45, %p46
      %p48 = scmp.ne.s32.totalorder %s37, %s40
      %p49 = scmp.eq.s32.totalorder %s18, 1
      %p50 = por %p48, %p49
      %p51 = scmp.ne.s32.totalorder %s40, %s41
      %p52 = scmp.eq.s32.totalorder %s18, 0
      %p53 = por %p51, %p52
      %p54 = scmp.ne.s32.totalorder %s40, %s41
      %p55 = scmp.eq.s32.totalorder %s19, 1
      %p56 = por %p54, %p55
      %p58 = scmp.ne.s32.totalorder %s41, %s57
      %p59 = scmp.eq.s32.totalorder %s19, 0
      %p60 = por %p58, %p59
      %s62 = sadd.s32 %s61, 1
      %p65 = scmp.eq.s32.totalorder %s13, 1
      %p66 = scmp.ne.s32.totalorder %s61, %s63
      %p67 = scmp.eq.s32.totalorder %s13, 0
      %p68 = por %p66, %p67
      %p69 = scmp.ne.s32.totalorder %s61, %s63
      %p70 = scmp.eq.s32.totalorder %s18, 1
      %p71 = por %p69, %p70
      %p72 = scmp.ne.s32.totalorder %s63, %s64
      %p73 = scmp.eq.s32.totalorder %s18, 0
      %p74 = por %p72, %p73
      %p75 = scmp.ne.s32.totalorder %s63, %s64
      %p76 = scmp.eq.s32.totalorder %s19, 1
      %p77 = por %p75, %p76
      %p79 = scmp.ne.s32.totalorder %s64, %s78
      %p80 = scmp.eq.s32.totalorder %s19, 0
      %p81 = por %p79, %p80
      %s82 = ssub.s32 %s20, %s32
      %p83 = scmp.eq.s32.totalorder %s82, 0
      %s85 = sadd.s32 %s84, 1
      %s86 = scalar_select %p83, %s84, %s85
      %p89 = pneg %p83
      %p90 = scmp.eq.s32.totalorder %s13, 1
      %p91 = por %p89, %p90
      %p92 = scmp.ne.s32.totalorder %s84, %s87
      %p93 = scmp.eq.s32.totalorder %s13, 0
      %p94 = por %p92, %p93
      %p95 = scmp.ne.s32.totalorder %s84, %s87
      %p96 = scmp.eq.s32.totalorder %s18, 1
      %p97 = por %p95, %p96
      %p98 = scmp.ne.s32.totalorder %s87, %s88
      %p99 = scmp.eq.s32.totalorder %s18, 0
      %p100 = por %p98, %p99
      %p101 = scmp.ne.s32.totalorder %s87, %s88
      %p102 = scmp.eq.s32.totalorder %s19, 1
      %p103 = por %p101, %p102
      %p105 = scmp.ne.s32.totalorder %s88, %s104
      %p106 = scmp.eq.s32.totalorder %s19, 0
      %p107 = por %p105, %p106
      %s109 = sadd.s32 %s108, 1
      %p112 = scmp.eq.s32.totalorder %s13, 1
      %p113 = scmp.ne.s32.totalorder %s108, %s110
      %p114 = scmp.eq.s32.totalorder %s13, 0
      %p115 = por %p113, %p114
      %p116 = scmp.ne.s32.totalorder %s108, %s110
      %p117 = scmp.eq.s32.totalorder %s18, 1
      %p118 = por %p116, %p117
      %p119 = scmp.ne.s32.totalorder %s110, %s111
      %p120 = scmp.eq.s32.totalorder %s18, 0
      %p121 = por %p119, %p120
      %p122 = scmp.ne.s32.totalorder %s110, %s111
      %p123 = scmp.eq.s32.totalorder %s19, 1
      %p124 = por %p122, %p123
      %p126 = scmp.ne.s32.totalorder %s111, %s125
      %p127 = scmp.eq.s32.totalorder %s19, 0
      %p128 = por %p126, %p127
      %s129 = ssub.s32 %s21, %s28
      %s130 = ssub.s32 %s20, %s32
      %s131 = sor.u32 %s129, %s130
      %p132 = scmp.eq.s32.totalorder %s131, 0
      %s134 = sadd.s32 %s133, 1
      %s135 = scalar_select %p132, %s133, %s134
      %p138 = pneg %p132
      %p139 = scmp.eq.s32.totalorder %s13, 1
      %p140 = por %p138, %p139
      %p141 = scmp.ne.s32.totalorder %s133, %s136
      %p142 = scmp.eq.s32.totalorder %s13, 0
      %p143 = por %p141, %p142
      %p144 = scmp.ne.s32.totalorder %s133, %s136
      %p145 = scmp.eq.s32.totalorder %s18, 1
      %p146 = por %p144, %p145
      %p147 = scmp.ne.s32.totalorder %s136, %s137
      %p148 = scmp.eq.s32.totalorder %s18, 0
      %p149 = por %p147, %p148
      %p150 = scmp.ne.s32.totalorder %s136, %s137
      %p151 = scmp.eq.s32.totalorder %s19, 1
      %p152 = por %p150, %p151
      %p154 = scmp.ne.s32.totalorder %s137, %s153
      %p155 = scmp.eq.s32.totalorder %s19, 0
      %p156 = por %p154, %p155
      %p157 = scmp.le.s32.totalorder 1, %s13
      %p158 = scmp.lt.s32.totalorder %s13, 3
      %p159 = pnand %p157, %p158
      %p160 = pneg %p159
      // Predicated region
      $region9: #{siglip_vision_embeddings.2} parent=5 // pred_check
        _
      $region10: #{siglip_vision_embeddings.2} parent=5 // pred_check_branch
        %162 = sbr.rel (%p159) target = $region12
      $region11: #{siglip_vision_embeddings.2} parent=5 // pred_region
        %s163 = ssub.s32 %s13, 1
        // Predicated region
        $region13: #{siglip_vision_embeddings.2} parent=11 // pred_check
          %p164 = pneg %p74
        $region14: #{siglip_vision_embeddings.2} parent=11 // pred_check_branch
          %166 = sbr.rel (%p164) target = $region16
        $region15: #{siglip_vision_embeddings.2} parent=11 // pred_region
          _
        $region16: #{siglip_vision_embeddings.2} parent=11 // pred_fallthru
          _
        // Predicated region
        $region17: #{siglip_vision_embeddings.2} parent=11 // pred_check
          %p167 = pneg %p100
        $region18: #{siglip_vision_embeddings.2} parent=11 // pred_check_branch
          %169 = sbr.rel (%p167) target = $region20
        $region19: #{siglip_vision_embeddings.2} parent=11 // pred_region
          %p170 = scmp.lt.s32.totalorder %s22, 0
          %s171 = scalar_select %p170, %s22, 0
          %s172 = smul.addr %s171, 4
          %s173 = scalar_lea.vmem %s2, %s172
        $region20: #{siglip_vision_embeddings.2} parent=11 // pred_fallthru
          _
        // Predicated region
        $region21: #{siglip_vision_embeddings.2} parent=11 // pred_check
          %p174 = pneg %p121
        $region22: #{siglip_vision_embeddings.2} parent=11 // pred_check_branch
          %176 = sbr.rel (%p174) target = $region24
        $region23: #{siglip_vision_embeddings.2} parent=11 // pred_region
          _
        $region24: #{siglip_vision_embeddings.2} parent=11 // pred_fallthru
          _
      $region12: #{siglip_vision_embeddings.2} parent=5 // pred_fallthru
        _
      %p177 = scmp.lt.s32.totalorder %s13, 2
      // Predicated region
      $region25: #{siglip_vision_embeddings.2} parent=5 // pred_check
        %p178 = pneg %p177
      $region26: #{siglip_vision_embeddings.2} parent=5 // pred_check_branch
        %180 = sbr.rel (%p178) target = $region28
      $region27: #{siglip_vision_embeddings.2} parent=5 // pred_region
        // Predicated region
        $region29: #{siglip_vision_embeddings.2} parent=27 // pred_check
          %p181 = pneg %p47
        $region30: #{siglip_vision_embeddings.2} parent=27 // pred_check_branch
          %183 = sbr.rel (%p181) target = $region32
        $region31: #{siglip_vision_embeddings.2} parent=27 // pred_region
          %p184 = scmp.lt.s32.totalorder %s21, 1
          %s185 = scalar_select %p184, %s21, 1
          %p186 = scmp.lt.s32.totalorder %s20, 0
          %s187 = scalar_select %p186, %s20, 0
          %s188 = smul.addr %s187, 2
          %s189 = smul.addr %s185, 2
          %s190 = sadd.s32 %s188, %s189
          %s191 = smul.addr %s190, 2
          %s192 = scalar_lea.vmem %s0, %s191
        $region32: #{siglip_vision_embeddings.2} parent=27 // pred_fallthru
          _
      $region28: #{siglip_vision_embeddings.2} parent=5 // pred_fallthru
        _
      %p193 = scmp.le.s32.totalorder 1, %s13
      %p194 = scmp.lt.s32.totalorder %s13, 3
      %p195 = pnand %p193, %p194
      %p196 = pneg %p195
      // Predicated region
      $region33: #{siglip_vision_embeddings.2} parent=5 // pred_check
        _
      $region34: #{siglip_vision_embeddings.2} parent=5 // pred_check_branch
        %198 = sbr.rel (%p195) target = $region36
      $region35: #{siglip_vision_embeddings.2} parent=5 // pred_region
        #allocation4 [shape = 'u8[2048]{0}', space=vmem, size = 0x800, dematerialized = true, scoped, tag = 'FusionAdapter Buffer %fusion.1 = f32[4,32]{1,0:T(4,128)} fusion(%param_2.1, %param_3.1), kind=kLoop, calls=%fused_computation.2.clone, metadata={op_name="jit(siglip_vision_embeddings)/add" stack_frame_id=12}']
        %s199 = ssub.s32 %s13, 1
        %p200 = scmp.lt.s32.totalorder %s23, 1
        %s201 = scalar_select %p200, %s23, 1
        %p202 = scmp.lt.s32.totalorder %s22, 0
        %s203 = scalar_select %p202, %s22, 0
        %s204 = smul.addr %s203, 2
        %s205 = smul.addr %s201, 2
        %s206 = sadd.s32 %s204, %s205
        %s207 = smul.addr %s206, 2
        %s208 = scalar_lea.vmem %s0, %s207
        %p209 = pneg %p53
        %p210 = pneg %p50
        %p211 = pneg %p74
        %p212 = pneg %p71
        %p213 = scmp.lt.s32.totalorder %s22, 0
        %s214 = scalar_select %p213, %s22, 0
        %s215 = smul.addr %s214, 4
        %s216 = scalar_lea.vmem %s2, %s215
        %p217 = pneg %p100
        %p218 = pneg %p97
        %p219 = pneg %p121
        %p220 = pneg %p118
        %p221 = pneg %p149
        %p222 = pneg %p146
        %s223 = sand.u32 %s136, 1
        %s224 = scalar_lea.sflag [#allocation3], %s223
        %s225 = sand.u32 %s136, 1
        %s226 = smul.addr %s225, 4
        %s227 = scalar_lea.vmem [#allocation2], %s226
        %p228 = scmp.lt.s32.totalorder %s23, 1
        %s229 = scalar_select %p228, %s23, 1
        %p230 = scmp.lt.s32.totalorder %s22, 0
        %s231 = scalar_select %p230, %s22, 0
        %s232 = smul.addr %s231, 2
        %s233 = smul.addr %s229, 2
        %s234 = sadd.s32 %s232, %s233
        %s235 = smul.addr %s234, 2
        %s236 = scalar_lea.vmem %s0, %s235
        %p237 = scmp.lt.s32.totalorder %s22, 0
        %s238 = scalar_select %p237, %s22, 0
        %s239 = smul.addr %s238, 4
        %s240 = scalar_lea.vmem %s2, %s239
        %s241 = smul.addr %s22, 4
        %v242 = vld [vmem:[%s240] sm:$0xf]
        %v243 = vld [vmem:[%s3] ss:$0 sm:$0xff]
        %244 = xla_tuple %v242, %v243
        %245 = xla_tuple %244
        %v246 = vadd.f32 %v242, %v243
        %247 = xla_tuple %v246
        %s249 = ssub.s32 16, 1
        %250 = vst [vmem:[#allocation4] sm:%s249] %v246
        %v252 = vld [vmem:[%s236] sm:$0xf]
        %v253 = vld [vmem:[%s1] sm:$0xf]
        %v254 = vld [vmem:[%s1 + $0x4] sm:$0xf]
        %v255 = vld [vmem:[%s1 + $0x8] sm:$0xf]
        %v256 = vld [vmem:[%s1 + $0xc] sm:$0xf]
        %v257 = vld [vmem:[%s1 + $0x10] sm:$0xf]
        %v258 = vld [vmem:[%s1 + $0x14] sm:$0xf]
        %v259 = vld [vmem:[%s1 + $0x18] sm:$0xf]
        %v260 = vld [vmem:[%s1 + $0x1c] sm:$0xf]
        %v261 = vld [vmem:[%s1 + $0x20] sm:$0xf]
        %v262 = vld [vmem:[%s1 + $0x24] sm:$0xf]
        %v263 = vld [vmem:[%s1 + $0x28] sm:$0xf]
        %v264 = vld [vmem:[%s1 + $0x2c] sm:$0xf]
        %v265 = vld [vmem:[%s1 + $0x30] sm:$0xf]
        %v266 = vld [vmem:[%s1 + $0x34] sm:$0xf]
        %v267 = vld [vmem:[%s1 + $0x38] sm:$0xf]
        %v268 = vld [vmem:[%s1 + $0x3c] sm:$0xf]
        %v269 = vld [vmem:[%s1 + $0x40] sm:$0xf]
        %v270 = vld [vmem:[%s1 + $0x44] sm:$0xf]
        %v271 = vld [vmem:[%s1 + $0x48] sm:$0xf]
        %v272 = vld [vmem:[%s1 + $0x4c] sm:$0xf]
        %v273 = vld [vmem:[%s1 + $0x50] sm:$0xf]
        %v274 = vld [vmem:[%s1 + $0x54] sm:$0xf]
        %v275 = vld [vmem:[%s1 + $0x58] sm:$0xf]
        %v276 = vld [vmem:[%s1 + $0x5c] sm:$0xf]
        %v277 = vld [vmem:[%s1 + $0x60] sm:$0xf]
        %v278 = vld [vmem:[%s1 + $0x64] sm:$0xf]
        %v279 = vld [vmem:[%s1 + $0x68] sm:$0xf]
        %v280 = vld [vmem:[%s1 + $0x6c] sm:$0xf]
        %v281 = vld [vmem:[%s1 + $0x70] sm:$0xf]
        %v282 = vld [vmem:[%s1 + $0x74] sm:$0xf]
        %v283 = vld [vmem:[%s1 + $0x78] sm:$0xf]
        %v284 = vld [vmem:[%s1 + $0x7c] sm:$0xf]
        %v285 = vld [vmem:[#allocation4] sm:$0xf]
        %v288 = vunpack.c.l.s4 1983009808
        %v289 = vunpack.c.0.s8 %v288
        %v290 = vlaneseq
        %v291 = vshrl.u32 %v290, 7
        %v292 = vsub.s32 %v289, %v291
        %v293 = vrot.slane %v252, %v292
        %v294 = vcombine.high %v293, %v293
        %v329 = vunpack.c.l.b16 %v253
        %v330 = vunpack.c.l.b16 %v254
        %v331 = vunpack.c.l.b16 %v255
        %v332 = vunpack.c.l.b16 %v256
        %v333 = vunpack.c.l.b16 %v257
        %v334 = vunpack.c.l.b16 %v258
        %v335 = vunpack.c.l.b16 %v259
        %v336 = vunpack.c.l.b16 %v260
        %v337 = vunpack.c.l.b16 %v261
        %v338 = vunpack.c.l.b16 %v262
        %v339 = vunpack.c.l.b16 %v263
        %v340 = vunpack.c.l.b16 %v264
        %v341 = vunpack.c.l.b16 %v265
        %v342 = vunpack.c.l.b16 %v266
        %v343 = vunpack.c.l.b16 %v267
        %v344 = vunpack.c.l.b16 %v268
        %v345 = vunpack.c.l.b16 %v269
        %v346 = vunpack.c.l.b16 %v270
        %v347 = vunpack.c.l.b16 %v271
        %v348 = vunpack.c.l.b16 %v272
        %v349 = vunpack.c.l.b16 %v273
        %v350 = vunpack.c.l.b16 %v274
        %v351 = vunpack.c.l.b16 %v275
        %v352 = vunpack.c.l.b16 %v276
        %v353 = vunpack.c.l.b16 %v277
        %v354 = vunpack.c.l.b16 %v278
        %v355 = vunpack.c.l.b16 %v279
        %v356 = vunpack.c.l.b16 %v280
        %v357 = vunpack.c.l.b16 %v281
        %v358 = vunpack.c.l.b16 %v282
        %v359 = vunpack.c.l.b16 %v283
        %v360 = vunpack.c.l.b16 %v284
        %v361 = vpack.c.b16 %v330, %v329
        %v362 = vpack.c.b16 %v332, %v331
        %v363 = vpack.c.b16 %v334, %v333
        %v364 = vpack.c.b16 %v336, %v335
        %v365 = vpack.c.b16 %v338, %v337
        %v366 = vpack.c.b16 %v340, %v339
        %v367 = vpack.c.b16 %v342, %v341
        %v368 = vpack.c.b16 %v344, %v343
        %v369 = vpack.c.b16 %v346, %v345
        %v370 = vpack.c.b16 %v348, %v347
        %v371 = vpack.c.b16 %v350, %v349
        %v372 = vpack.c.b16 %v352, %v351
        %v373 = vpack.c.b16 %v354, %v353
        %v374 = vpack.c.b16 %v356, %v355
        %v375 = vpack.c.b16 %v358, %v357
        %v376 = vpack.c.b16 %v360, %v359
        %393 = vmatprep.subr.bf16.mxu0 0
        %394 = vmatpush1.bf16.msra.mxu0 %v368
        %395 = vmatprep.subr.bf16.mxu0 0
        %396 = vmatpush1.bf16.msra.mxu0 %v367
        %397 = vmatprep.subr.bf16.mxu0 0
        %398 = vmatpush1.bf16.msra.mxu0 %v366
        %399 = vmatprep.subr.bf16.mxu0 0
        %400 = vmatpush1.bf16.msra.mxu0 %v365
        %401 = vmatprep.subr.bf16.mxu0 0
        %402 = vmatpush1.bf16.msra.mxu0 %v364
        %403 = vmatprep.subr.bf16.mxu0 0
        %404 = vmatpush1.bf16.msra.mxu0 %v363
        %405 = vmatprep.subr.bf16.mxu0 0
        %406 = vmatpush1.bf16.msra.mxu0 %v362
        %407 = vmatprep.subr.bf16.mxu0 0
        %408 = vmatpush1.bf16.msra.mxu0 %v361
        %409 = vmatprep.subr.bf16.mxu0 0
        %410 = vmatpush2.bf16.msra.mxu0 %v376
        %411 = vmatprep.subr.bf16.mxu0 0
        %412 = vmatpush2.bf16.msra.mxu0 %v375
        %413 = vmatprep.subr.bf16.mxu0 0
        %414 = vmatpush2.bf16.msra.mxu0 %v374
        %415 = vmatprep.subr.bf16.mxu0 0
        %416 = vmatpush2.bf16.msra.mxu0 %v373
        %417 = vmatprep.subr.bf16.mxu0 0
        %418 = vmatpush2.bf16.msra.mxu0 %v372
        %419 = vmatprep.subr.bf16.mxu0 0
        %420 = vmatpush2.bf16.msra.mxu0 %v371
        %421 = vmatprep.subr.bf16.mxu0 0
        %422 = vmatpush2.bf16.msra.mxu0 %v370
        %423 = vmatprep.subr.bf16.mxu0 0
        %424 = vmatpush2.bf16.msra.mxu0 %v369
        %425 = vmatprep.mubr.bf16.mxu0 %v294
        %426 = vmatmul.mubr.bf16.gmra.mxu0 %v293
        %v427 = vpop.f32.mrf.mxu0
        %v428 = vadd.f32 %v285, %v427
        %v429 = vpop.f32.mrf.mxu0
        %v430 = vpop.f32.mrf.mxu0
        %v431 = vpop.f32.mrf.mxu0
        %432 = vdwg.mxu0
        %vm433 = vcmask 257024
        %434 = vst.msk [vmem:[%s227] sm:$0xf] %vm433, %v428
        %s435 = sand.u32 %s136, 1
        %s436 = scalar_lea.sflag [#allocation3], %s435
        %s437 = sand.u32 %s136, 1
        %s438 = smul.addr %s437, 4
        %s439 = scalar_lea.vmem [#allocation2], %s438
        // Predicated region
        $region37: #{siglip_vision_embeddings.2} parent=35 // pred_check
          %p440 = pneg %p146
        $region38: #{siglip_vision_embeddings.2} parent=35 // pred_check_branch
          %442 = sbr.rel (%p440) target = $region40
        $region39: #{siglip_vision_embeddings.2} parent=35 // pred_region
          %s444 = ssub.s32 64, 64
          %445 = vsyncadd %s436, %s444
          %s446 = sadd.s32 %s22, %s23
          %s447 = smul.addr %s446, 64
          %s448 = scalar_lea.hbm %s4, %s447
          %s450 = sshll.u32 %s439, 4
          %s451 = int_to_ptr.vmem [resolvable:$true] %s450
          %453 = dma.vmem_to_hbm [thread:$0]  %s451, 64, %s448, %s436
        $region40: #{siglip_vision_embeddings.2} parent=35 // pred_fallthru
          _
      $region36: #{siglip_vision_embeddings.2} parent=5 // pred_fallthru
        _
      %p454 = scmp.le.s32.totalorder 2, %s13
      // Predicated region
      $region41: #{siglip_vision_embeddings.2} parent=5 // pred_check
        %p455 = pneg %p454
      $region42: #{siglip_vision_embeddings.2} parent=5 // pred_check_branch
        %457 = sbr.rel (%p455) target = $region44
      $region43: #{siglip_vision_embeddings.2} parent=5 // pred_region
        %s458 = ssub.s32 %s13, 2
        // Predicated region
        $region45: #{siglip_vision_embeddings.2} parent=43 // pred_check
          %p459 = pneg %p152
        $region46: #{siglip_vision_embeddings.2} parent=43 // pred_check_branch
          %461 = sbr.rel (%p459) target = $region48
        $region47: #{siglip_vision_embeddings.2} parent=43 // pred_region
          %s462 = sand.u32 %s137, 1
          %s463 = scalar_lea.sflag [#allocation3], %s462
          %s464 = sand.u32 %s137, 1
          %s465 = smul.addr %s464, 4
          %s466 = scalar_lea.vmem [#allocation2], %s465
          %467 = dma.done %s463, 64
        $region48: #{siglip_vision_embeddings.2} parent=43 // pred_fallthru
          _
      $region44: #{siglip_vision_embeddings.2} parent=5 // pred_fallthru
        _
    $region6: #{siglip_vision_embeddings.2} parent=1 // loop_footer
      %s17 = sadd.s32 1, %s13
    $region7: #{siglip_vision_embeddings.2} parent=1 // loop_footer_branch
      %12 = sbr.rel target = $region3
    $region8: #{siglip_vision_embeddings.2} parent=1 // loop_exit
      _
    %468 = vsyncpa [#allocation3], 1
    %s469 = scalar_lea.sflag [#allocation3], 1
    %470 = vsyncpa %s469, 1

</llo_original>
